<compile_context>
chip_gen: v7x
topology: tpu7x:2x2x1
jax: 0.10.0
libtpu: 0.0.40
codegen_flags: <defaults>
</compile_context>

<pallas_src>
import functools

import jax
import jax.numpy as jnp
from jax.experimental import pallas as pl
from jax.experimental.pallas import tpu as pltpu

OBS_DIM = 4       # CartPole-v1 observation dim
ACT_DIM = 2       # CartPole-v1 action dim
HIDDEN = 128
HEAD_OUT = 8      # sublane-aligned fused head rows: [logit0, logit1, value, 0*5]


def _round_up(x, m):
    return (x + m - 1) // m * m


def _cdiv(a, b):
    return -(-a // b)


def _tensorcores_per_chip():
    """Best-effort TensorCore-per-chip count (v7x megacore); falls back to 1."""
    try:
        get_info = getattr(pltpu, "get_tpu_info", None)
        if get_info is None:
            return 1
        info = get_info()
        for name in ("num_cores", "core_count", "num_tensorcores",
                     "tensorcores_per_chip"):
            v = getattr(info, name, None)
            if isinstance(v, int) and v > 0:
                return v
    except Exception:
        pass
    return 1


def _choose_bt(B, block_b, num_cores):
    """Batch (lane-axis) tile.  Must be a multiple of 128 or the full extent."""
    block_b = max(128, (block_b // 128) * 128)
    if num_cores >= 2 and B >= 256:
        # ensure >= num_cores grid steps so the parallel axis shards across TCs
        bt = min(block_b, _round_up(_cdiv(B, num_cores), 128))
    else:
        bt = block_b
    if bt >= B:
        return B              # single full-extent block (always legal)
    return bt


def actor_critic_kernel(obs_t_ref, w1t_ref, b1t_ref, wht_ref, bht_ref, out_ref):
    """One batch tile, batch on the lane axis.

    obs_t  : (OBS_DIM, BT)      w1t : (HIDDEN, OBS_DIM)   b1t : (HIDDEN, 1)
    wht    : (HEAD_OUT, HIDDEN) bht : (HEAD_OUT, 1)
    out    : (HEAD_OUT, BT)  rows = [logit0, logit1, value, zeros...]
    Both contractions run on the MXU; VPU only does bias + ReLU.
    """
    h = jnp.dot(w1t_ref[...], obs_t_ref[...],
                preferred_element_type=jnp.float32)          # (HIDDEN, BT)
    h = jnp.maximum(h + b1t_ref[...], 0.0)
    out_ref[...] = (
        jnp.dot(wht_ref[...], h, preferred_element_type=jnp.float32)
        + bht_ref[...]
    )


def prepare_params(params):
    """Convert torch-style params to kernel layout.

    Call ONCE per parameter update (not per forward): builds the transposed
    layer-1 weights and the fused, zero-padded actor+critic head.
    """
    w1, b1, wa, ba, wc, bc = params
    w1t = w1.T                                    # (HIDDEN, OBS_DIM)
    b1t = b1.reshape(HIDDEN, 1)                   # (HIDDEN, 1)
    wht = jnp.zeros((HEAD_OUT, HIDDEN), jnp.float32)
    wht = wht.at[:ACT_DIM, :].set(wa.T)           # actor rows
    wht = wht.at[ACT_DIM, :].set(wc[:, 0])        # critic row
    bht = jnp.zeros((HEAD_OUT, 1), jnp.float32)
    bht = bht.at[:ACT_DIM, 0].set(ba[0])
    bht = bht.at[ACT_DIM, 0].set(bc[0, 0])
    return (w1t, b1t, wht, bht)


@functools.partial(jax.jit, static_argnames=("block_b", "num_cores"))
def actor_critic_forward(obs, kparams, *, block_b=2048, num_cores=None):
    """obs: (B, OBS_DIM) f32, kparams from prepare_params()
    -> (logits (B, ACT_DIM), value (B, 1)).

    # TODO(synk): for production A2C this tiny forward is launch/DMA-bound;
    # ideally it is fused into the surrounding train/act step rather than a
    # standalone pallas_call.
    """
    w1t, b1t, wht, bht = kparams
    B = obs.shape[0]
    if num_cores is None:
        num_cores = _tensorcores_per_chip()

    BT = _choose_bt(B, block_b, num_cores)
    grid = (pl.cdiv(B, BT),)

    obs_t = obs.T                                  # (OBS_DIM, B): batch on lanes

    out_t = pl.pallas_call(
        actor_critic_kernel,
        out_shape=jax.ShapeDtypeStruct((HEAD_OUT, B), jnp.float32),
        grid=grid,
        in_specs=[
            pl.BlockSpec((OBS_DIM, BT), lambda i: (0, i)),        # obs^T tile
            pl.BlockSpec((HIDDEN, OBS_DIM), lambda i: (0, 0)),    # W1^T (resident)
            pl.BlockSpec((HIDDEN, 1), lambda i: (0, 0)),          # b1   (resident)
            pl.BlockSpec((HEAD_OUT, HIDDEN), lambda i: (0, 0)),   # fused head W^T
            pl.BlockSpec((HEAD_OUT, 1), lambda i: (0, 0)),        # fused head b
        ],
        out_specs=pl.BlockSpec((HEAD_OUT, BT), lambda i: (0, i)),
        compiler_params=pltpu.CompilerParams(
            dimension_semantics=("parallel",)),
    )(obs_t, w1t, b1t, wht, bht)

    logits = out_t[:ACT_DIM, :].T                  # (B, ACT_DIM)
    value = out_t[ACT_DIM:ACT_DIM + 1, :].T        # (B, 1)
    return logits, value


def init_params(key):
    """Deterministic PyTorch-style (Kaiming-uniform-ish) init, shapes only."""
    k1, k2, k3, k4, k5, k6 = jax.random.split(key, 6)

    def unif(k, shape, fan_in):
        bound = 1.0 / jnp.sqrt(jnp.float32(fan_in))
        return jax.random.uniform(k, shape, jnp.float32, -bound, bound)

    # stored as (in, out) = transposed relative to torch's (out, in)
    w1 = unif(k1, (OBS_DIM, HIDDEN), OBS_DIM)
    b1 = unif(k2, (1, HIDDEN), OBS_DIM)
    wa = unif(k3, (HIDDEN, ACT_DIM), HIDDEN)
    ba = unif(k4, (1, ACT_DIM), HIDDEN)
    wc = unif(k5, (HIDDEN, 1), HIDDEN)
    bc = unif(k6, (1, 1), HIDDEN)
    return (w1, b1, wa, ba, wc, bc)


def reference_forward(obs, params):
    """Plain-JAX reference for correctness check."""
    w1, b1, wa, ba, wc, bc = params
    x = jnp.maximum(obs @ w1 + b1, 0.0)
    return x @ wa + ba, x @ wc + bc


if __name__ == "__main__":
    key = jax.random.PRNGKey(0)
    pkey, okey1, okey2 = jax.random.split(key, 3)

    params = init_params(pkey)
    kparams = prepare_params(params)   # hoisted: once per param update

    # 1) Small batch (single full-extent block).
    batch = 8
    obs = jax.random.normal(okey1, (batch, OBS_DIM), dtype=jnp.float32)
    logits, value = jax.block_until_ready(actor_critic_forward(obs, kparams))
    ref_logits, ref_value = reference_forward(obs, params)
    assert logits.shape == (batch, ACT_DIM) and logits.dtype == jnp.float32
    assert value.shape == (batch, 1) and value.dtype == jnp.float32
    assert jnp.allclose(logits, ref_logits, atol=1e-5, rtol=1e-5)
    assert jnp.allclose(value, ref_value, atol=1e-5, rtol=1e-5)

    # 2) Non-multiple batch, default tiling (whatever the chip detection picks).
    batch2 = 300
    obs2 = jax.random.normal(okey2, (batch2, OBS_DIM), dtype=jnp.float32)
    ref_logits2, ref_value2 = reference_forward(obs2, params)
    logits2, value2 = jax.block_until_ready(actor_critic_forward(obs2, kparams))
    assert logits2.shape == (batch2, ACT_DIM) and value2.shape == (batch2, 1)
    assert jnp.allclose(logits2, ref_logits2, atol=1e-5, rtol=1e-5)
    assert jnp.allclose(value2, ref_value2, atol=1e-5, rtol=1e-5)

    # 3) Forced multi-step grid with a partial last block (128-lane tiles).
    logits3, value3 = jax.block_until_ready(
        actor_critic_forward(obs2, kparams, block_b=128, num_cores=1))
    assert jnp.allclose(logits3, ref_logits2, atol=1e-5, rtol=1e-5)
    assert jnp.allclose(value3, ref_value2, atol=1e-5, rtol=1e-5)

    # 4) Forced 2-way split (v7x-style megacore sharding path).
    logits4, value4 = jax.block_until_ready(
        actor_critic_forward(obs2, kparams, num_cores=2))
    assert jnp.allclose(logits4, ref_logits2, atol=1e-5, rtol=1e-5)
    assert jnp.allclose(value4, ref_value2, atol=1e-5, rtol=1e-5)

    print("KERNEL_OK")
</pallas_src>

<mosaic_0001>
module attributes {stable_mosaic.version = 11 : i64} {
  func.func @actor_critic_kernel(%arg0: i32, %arg1: memref<4x8xf32, #tpu.memory_space<vmem>>, %arg2: memref<128x4xf32, #tpu.memory_space<vmem>>, %arg3: memref<128x1xf32, #tpu.memory_space<vmem>>, %arg4: memref<8x128xf32, #tpu.memory_space<vmem>>, %arg5: memref<8x1xf32, #tpu.memory_space<vmem>>, %arg6: memref<8x8xf32, #tpu.memory_space<vmem>>) attributes {dimension_semantics = [#tpu.dimension_semantics<parallel>], iteration_bounds = array<i64: 1>, scalar_prefetch = 0 : i64, scratch_operands = 0 : i64, tpu.core_type = #tpu.core_type<tc>, window_params = [{transform_indices = @transform_0, window_bounds = array<i64: 4, 8>}, {pipeline_mode = #tpu.pipeline_mode<synchronous>, transform_indices = @transform_1, window_bounds = array<i64: 128, 4>}, {pipeline_mode = #tpu.pipeline_mode<synchronous>, transform_indices = @transform_2, window_bounds = array<i64: 128, 1>}, {pipeline_mode = #tpu.pipeline_mode<synchronous>, transform_indices = @transform_3, window_bounds = array<i64: 8, 128>}, {pipeline_mode = #tpu.pipeline_mode<synchronous>, transform_indices = @transform_4, window_bounds = array<i64: 8, 1>}, {transform_indices = @transform_5, window_bounds = array<i64: 8, 8>}]} {
    %c0 = arith.constant 0 : index
    %c0_0 = arith.constant 0 : index
    %0 = vector.load %arg2[%c0, %c0_0] : memref<128x4xf32, #tpu.memory_space<vmem>>, vector<128x4xf32>
    %c0_1 = arith.constant 0 : index
    %c0_2 = arith.constant 0 : index
    %1 = vector.load %arg1[%c0_1, %c0_2] : memref<4x8xf32, #tpu.memory_space<vmem>>, vector<4x8xf32>
    %cst = arith.constant dense<0.000000e+00> : vector<128x8xf32>
    %2 = tpu.matmul %0, %1, %cst {dimension_numbers = #tpu.dot_dimension_numbers<[1], [0], [0], [1], [0, 0, 1, 1], [], []>} : vector<128x4xf32>, vector<4x8xf32>, vector<128x8xf32> -> vector<128x8xf32>
    %c0_3 = arith.constant 0 : index
    %c0_4 = arith.constant 0 : index
    %3 = vector.load %arg3[%c0_3, %c0_4] : memref<128x1xf32, #tpu.memory_space<vmem>>, vector<128x1xf32>
    %4 = vector.broadcast %3 : vector<128x1xf32> to vector<128x8xf32>
    %5 = arith.addf %2, %4 : vector<128x8xf32>
    %cst_5 = arith.constant 0.000000e+00 : f32
    %6 = vector.broadcast %cst_5 : f32 to vector<128x8xf32>
    %7 = arith.maximumf %5, %6 : vector<128x8xf32>
    %c0_6 = arith.constant 0 : index
    %c0_7 = arith.constant 0 : index
    %8 = vector.load %arg4[%c0_6, %c0_7] : memref<8x128xf32, #tpu.memory_space<vmem>>, vector<8x128xf32>
    %cst_8 = arith.constant dense<0.000000e+00> : vector<8x8xf32>
    %9 = tpu.matmul %8, %7, %cst_8 {dimension_numbers = #tpu.dot_dimension_numbers<[1], [0], [0], [1], [0, 0, 1, 1], [], []>} : vector<8x128xf32>, vector<128x8xf32>, vector<8x8xf32> -> vector<8x8xf32>
    %c0_9 = arith.constant 0 : index
    %c0_10 = arith.constant 0 : index
    %10 = vector.load %arg5[%c0_9, %c0_10] : memref<8x1xf32, #tpu.memory_space<vmem>>, vector<8x1xf32>
    %11 = vector.broadcast %10 : vector<8x1xf32> to vector<8x8xf32>
    %12 = arith.addf %9, %11 : vector<8x8xf32>
    %c0_11 = arith.constant 0 : index
    %c0_12 = arith.constant 0 : index
    %13 = vector.load %arg6[%c0_11, %c0_12] : memref<8x8xf32, #tpu.memory_space<vmem>>, vector<8x8xf32>
    tpu.vector_store %arg6[%c0_11, %c0_12], %12 {strides = array<i32>} : memref<8x8xf32, #tpu.memory_space<vmem>>, vector<8x8xf32>,
    return
  }
  func.func @transform_0(%arg0: i32) -> (i32, i32) {
    %c0_i32 = arith.constant 0 : i32
    %c0_i32_0 = arith.constant 0 : i32
    return %c0_i32, %arg0 : i32, i32
  }
  func.func @transform_1(%arg0: i32) -> (i32, i32) {
    %c0_i32 = arith.constant 0 : i32
    %c0_i32_0 = arith.constant 0 : i32
    %c0_i32_1 = arith.constant 0 : i32
    return %c0_i32, %c0_i32_0 : i32, i32
  }
  func.func @transform_2(%arg0: i32) -> (i32, i32) {
    %c0_i32 = arith.constant 0 : i32
    %c0_i32_0 = arith.constant 0 : i32
    %c0_i32_1 = arith.constant 0 : i32
    return %c0_i32, %c0_i32_0 : i32, i32
  }
  func.func @transform_3(%arg0: i32) -> (i32, i32) {
    %c0_i32 = arith.constant 0 : i32
    %c0_i32_0 = arith.constant 0 : i32
    %c0_i32_1 = arith.constant 0 : i32
    return %c0_i32, %c0_i32_0 : i32, i32
  }
  func.func @transform_4(%arg0: i32) -> (i32, i32) {
    %c0_i32 = arith.constant 0 : i32
    %c0_i32_0 = arith.constant 0 : i32
    %c0_i32_1 = arith.constant 0 : i32
    return %c0_i32, %c0_i32_0 : i32, i32
  }
  func.func @transform_5(%arg0: i32) -> (i32, i32) {
    %c0_i32 = arith.constant 0 : i32
    %c0_i32_0 = arith.constant 0 : i32
    return %c0_i32, %arg0 : i32, i32
  }
}

</mosaic_0001>

<llo_original>
// kernel: actor_critic_forward.1
$region0: #{actor_critic_forward.1}
  #allocation0 [shape = 'u32[]', space=smem, size = 0x4, offset = 0x4, fixed_abs, tag = 'smem constant byte address 0x4 - core index']
  #allocation1 [shape = 'u32[144,128]{1,0:T(1,128)}', space=vmem, size = 0x12000, scoped, tag = 'internal scratch']
  %s0 = inlined_call_operand.vmem [shape: f32[4,8], index: 0, kind: input, shape index: {}]
  %s1 = inlined_call_operand.vmem [shape: f32[128,4], index: 1, kind: input, shape index: {}]
  %s2 = inlined_call_operand.vmem [shape: f32[128,1], index: 2, kind: input, shape index: {}]
  %s3 = inlined_call_operand.vmem [shape: f32[8,128], index: 3, kind: input, shape index: {}]
  %s4 = inlined_call_operand.vmem [shape: f32[8,1], index: 4, kind: input, shape index: {}]
  %s5 = inlined_call_operand.vmem [shape: f32[8,8], index: 5, kind: output, shape index: {}]
  %s6 = sld [smem:[#allocation0]]
  $region30: #{actor_critic_forward.1} parent=0
    _
  %s8 = ssub.s32 1, %s6
  %s9 = scalar_select 0, %s8, %s6
  // Predicated region
  $region2: #{actor_critic_forward.1} parent=0 // pred_check
    _
  $region3: #{actor_critic_forward.1} parent=0 // pred_check_branch
    %11 = sbr.rel (0) target = $region5
  $region4: #{actor_critic_forward.1} parent=0 // pred_region
    _
  $region5: #{actor_critic_forward.1} parent=0 // pred_fallthru
    _
  // Predicated region
  $region6: #{actor_critic_forward.1} parent=0 // pred_check
    _
  $region7: #{actor_critic_forward.1} parent=0 // pred_check_branch
    %13 = sbr.rel (0) target = $region9
  $region8: #{actor_critic_forward.1} parent=0 // pred_region
    _
  $region9: #{actor_critic_forward.1} parent=0 // pred_fallthru
    _
  // Predicated region
  $region10: #{actor_critic_forward.1} parent=0 // pred_check
    _
  $region11: #{actor_critic_forward.1} parent=0 // pred_check_branch
    %15 = sbr.rel (0) target = $region13
  $region12: #{actor_critic_forward.1} parent=0 // pred_region
    _
  $region13: #{actor_critic_forward.1} parent=0 // pred_fallthru
    _
  // Predicated region
  $region14: #{actor_critic_forward.1} parent=0 // pred_check
    _
  $region15: #{actor_critic_forward.1} parent=0 // pred_check_branch
    %17 = sbr.rel (0) target = $region17
  $region16: #{actor_critic_forward.1} parent=0 // pred_region
    _
  $region17: #{actor_critic_forward.1} parent=0 // pred_fallthru
    _
  // Predicated region
  $region18: #{actor_critic_forward.1} parent=0 // pred_check
    _
  $region19: #{actor_critic_forward.1} parent=0 // pred_check_branch
    %19 = sbr.rel (0) target = $region21
  $region20: #{actor_critic_forward.1} parent=0 // pred_region
    _
  $region21: #{actor_critic_forward.1} parent=0 // pred_fallthru
    _
  %v20 = vld [vmem:[%s1] sm:$0xff]
  %v21 = vld [vmem:[%s1 + $0x8] sm:$0xff]
  %v22 = vld [vmem:[%s1 + $0x10] sm:$0xff]
  %v23 = vld [vmem:[%s1 + $0x18] sm:$0xff]
  %v24 = vld [vmem:[%s1 + $0x20] sm:$0xff]
  %v25 = vld [vmem:[%s1 + $0x28] sm:$0xff]
  %v26 = vld [vmem:[%s1 + $0x30] sm:$0xff]
  %v27 = vld [vmem:[%s1 + $0x38] sm:$0xff]
  %v28 = vld [vmem:[%s1 + $0x40] sm:$0xff]
  %v29 = vld [vmem:[%s1 + $0x48] sm:$0xff]
  %v30 = vld [vmem:[%s1 + $0x50] sm:$0xff]
  %v31 = vld [vmem:[%s1 + $0x58] sm:$0xff]
  %v32 = vld [vmem:[%s1 + $0x60] sm:$0xff]
  %v33 = vld [vmem:[%s1 + $0x68] sm:$0xff]
  %v34 = vld [vmem:[%s1 + $0x70] sm:$0xff]
  %v35 = vld [vmem:[%s1 + $0x78] sm:$0xff]
  %v36 = vld [vmem:[%s0] sm:$0xf]
  %v37 = vld [vmem:[%s2] sm:$0xff]
  %v38 = vld [vmem:[%s2 + $0x8] sm:$0xff]
  %v39 = vld [vmem:[%s2 + $0x10] sm:$0xff]
  %v40 = vld [vmem:[%s2 + $0x18] sm:$0xff]
  %v41 = vld [vmem:[%s2 + $0x20] sm:$0xff]
  %v42 = vld [vmem:[%s2 + $0x28] sm:$0xff]
  %v43 = vld [vmem:[%s2 + $0x30] sm:$0xff]
  %v44 = vld [vmem:[%s2 + $0x38] sm:$0xff]
  %v45 = vld [vmem:[%s2 + $0x40] sm:$0xff]
  %v46 = vld [vmem:[%s2 + $0x48] sm:$0xff]
  %v47 = vld [vmem:[%s2 + $0x50] sm:$0xff]
  %v48 = vld [vmem:[%s2 + $0x58] sm:$0xff]
  %v49 = vld [vmem:[%s2 + $0x60] sm:$0xff]
  %v50 = vld [vmem:[%s2 + $0x68] sm:$0xff]
  %v51 = vld [vmem:[%s2 + $0x70] sm:$0xff]
  %v52 = vld [vmem:[%s2 + $0x78] sm:$0xff]
  %54 = vset.pattern.permute.xlu0 0
  %55 = vperm.xlu0 %54, %v37
  %v56 = vpop.permute.xlu0 %55
  %59 = vset.pattern.permute.xlu0 0
  %60 = vperm.xlu0 %59, %v38
  %v61 = vpop.permute.xlu0 %60
  %64 = vset.pattern.permute.xlu0 0
  %65 = vperm.xlu0 %64, %v39
  %v66 = vpop.permute.xlu0 %65
  %69 = vset.pattern.permute.xlu0 0
  %70 = vperm.xlu0 %69, %v40
  %v71 = vpop.permute.xlu0 %70
  %74 = vset.pattern.permute.xlu0 0
  %75 = vperm.xlu0 %74, %v41
  %v76 = vpop.permute.xlu0 %75
  %79 = vset.pattern.permute.xlu0 0
  %80 = vperm.xlu0 %79, %v42
  %v81 = vpop.permute.xlu0 %80
  %84 = vset.pattern.permute.xlu0 0
  %85 = vperm.xlu0 %84, %v43
  %v86 = vpop.permute.xlu0 %85
  %89 = vset.pattern.permute.xlu0 0
  %90 = vperm.xlu0 %89, %v44
  %v91 = vpop.permute.xlu0 %90
  %94 = vset.pattern.permute.xlu0 0
  %95 = vperm.xlu0 %94, %v45
  %v96 = vpop.permute.xlu0 %95
  %99 = vset.pattern.permute.xlu0 0
  %100 = vperm.xlu0 %99, %v46
  %v101 = vpop.permute.xlu0 %100
  %104 = vset.pattern.permute.xlu0 0
  %105 = vperm.xlu0 %104, %v47
  %v106 = vpop.permute.xlu0 %105
  %109 = vset.pattern.permute.xlu0 0
  %110 = vperm.xlu0 %109, %v48
  %v111 = vpop.permute.xlu0 %110
  %114 = vset.pattern.permute.xlu0 0
  %115 = vperm.xlu0 %114, %v49
  %v116 = vpop.permute.xlu0 %115
  %119 = vset.pattern.permute.xlu0 0
  %120 = vperm.xlu0 %119, %v50
  %v121 = vpop.permute.xlu0 %120
  %124 = vset.pattern.permute.xlu0 0
  %125 = vperm.xlu0 %124, %v51
  %v126 = vpop.permute.xlu0 %125
  %129 = vset.pattern.permute.xlu0 0
  %130 = vperm.xlu0 %129, %v52
  %v131 = vpop.permute.xlu0 %130
  %vm133 = vcmask 31744
  %v135 = vsel %vm133, %v20, 0
  %v138 = vsel %vm133, %v21, 0
  %v141 = vsel %vm133, %v22, 0
  %v144 = vsel %vm133, %v23, 0
  %v147 = vsel %vm133, %v24, 0
  %v150 = vsel %vm133, %v25, 0
  %v153 = vsel %vm133, %v26, 0
  %v156 = vsel %vm133, %v27, 0
  %v159 = vsel %vm133, %v28, 0
  %v162 = vsel %vm133, %v29, 0
  %v165 = vsel %vm133, %v30, 0
  %v168 = vsel %vm133, %v31, 0
  %v171 = vsel %vm133, %v32, 0
  %v174 = vsel %vm133, %v33, 0
  %v177 = vsel %vm133, %v34, 0
  %v180 = vsel %vm133, %v35, 0
  %vm182 = vcmask 1043456
  %v184 = vsel %vm182, %v36, 0
  %186 = vmatprep.subr.mxu0 0.0
  %187 = vmatpush1.msra.mxu0 %v184
  %188 = vmatprep.subr.mxu0 0.0
  %189 = vmatpush1.msra.mxu0 0.0
  %190 = vmatprep.subr.mxu0 0.0
  %191 = vmatpush1.msra.mxu0 0.0
  %192 = vmatprep.subr.mxu0 0.0
  %193 = vmatpush1.msra.mxu0 0.0
  %194 = vmatprep.subr.mxu0 0.0
  %195 = vmatpush1.msra.mxu0 0.0
  %196 = vmatprep.subr.mxu0 0.0
  %197 = vmatpush1.msra.mxu0 0.0
  %198 = vmatprep.subr.mxu0 0.0
  %199 = vmatpush1.msra.mxu0 0.0
  %200 = vmatprep.subr.mxu0 0.0
  %201 = vmatpush1.msra.mxu0 0.0
  %202 = vmatprep.subr.mxu0 0.0
  %203 = vmatpush1.msra.mxu0 0.0
  %204 = vmatprep.subr.mxu0 0.0
  %205 = vmatpush1.msra.mxu0 0.0
  %206 = vmatprep.subr.mxu0 0.0
  %207 = vmatpush1.msra.mxu0 0.0
  %208 = vmatprep.subr.mxu0 0.0
  %209 = vmatpush1.msra.mxu0 0.0
  %210 = vmatprep.subr.mxu0 0.0
  %211 = vmatpush1.msra.mxu0 0.0
  %212 = vmatprep.subr.mxu0 0.0
  %213 = vmatpush1.msra.mxu0 0.0
  %214 = vmatprep.subr.mxu0 0.0
  %215 = vmatpush1.msra.mxu0 0.0
  %216 = vmatprep.subr.mxu0 0.0
  %217 = vmatpush1.msra.mxu0 0.0
  %218 = vmatprep.subr.mxu0 0.0
  %219 = vmatpush1.msra.mxu0 0.0
  %220 = vmatprep.subr.mxu0 0.0
  %221 = vmatpush1.msra.mxu0 0.0
  %222 = vmatprep.subr.mxu0 0.0
  %223 = vmatpush1.msra.mxu0 0.0
  %224 = vmatprep.subr.mxu0 0.0
  %225 = vmatpush1.msra.mxu0 0.0
  %226 = vmatprep.subr.mxu0 0.0
  %227 = vmatpush1.msra.mxu0 0.0
  %228 = vmatprep.subr.mxu0 0.0
  %229 = vmatpush1.msra.mxu0 0.0
  %230 = vmatprep.subr.mxu0 0.0
  %231 = vmatpush1.msra.mxu0 0.0
  %232 = vmatprep.subr.mxu0 0.0
  %233 = vmatpush1.msra.mxu0 0.0
  %234 = vmatprep.subr.mxu0 0.0
  %235 = vmatpush1.msra.mxu0 0.0
  %236 = vmatprep.subr.mxu0 0.0
  %237 = vmatpush1.msra.mxu0 0.0
  %238 = vmatprep.subr.mxu0 0.0
  %239 = vmatpush1.msra.mxu0 0.0
  %240 = vmatprep.subr.mxu0 0.0
  %241 = vmatpush1.msra.mxu0 0.0
  %242 = vmatprep.subr.mxu0 0.0
  %243 = vmatpush1.msra.mxu0 0.0
  %244 = vmatprep.subr.mxu0 0.0
  %245 = vmatpush1.msra.mxu0 0.0
  %246 = vmatprep.subr.mxu0 0.0
  %247 = vmatpush1.msra.mxu0 0.0
  %248 = vmatprep.subr.mxu0 0.0
  %249 = vmatpush1.msra.mxu0 0.0
  %250 = vmatprep.mubr.f32.mxu0 0.0
  %251 = vmatmul.mubr.f32.gmra.mrb[0].mxu0 %v135
  %v252 = vpop.f32.mrb[0].mxu0
  %v253 = vadd.f32 %v56, %v252
  %v254 = vpop.f32.mrb[0].mxu0
  %255 = vmatprep.mubr.f32.mxu0 0.0
  %256 = vmatmul.mubr.f32.gmra.mrb[0].mxu0 %v138
  %v257 = vpop.f32.mrb[0].mxu0
  %v258 = vadd.f32 %v61, %v257
  %v259 = vpop.f32.mrb[0].mxu0
  %260 = vmatprep.mubr.f32.mxu0 0.0
  %261 = vmatmul.mubr.f32.gmra.mrb[0].mxu0 %v141
  %v262 = vpop.f32.mrb[0].mxu0
  %v263 = vadd.f32 %v66, %v262
  %v264 = vpop.f32.mrb[0].mxu0
  %265 = vmatprep.mubr.f32.mxu0 0.0
  %266 = vmatmul.mubr.f32.gmra.mrb[0].mxu0 %v144
  %v267 = vpop.f32.mrb[0].mxu0
  %v268 = vadd.f32 %v71, %v267
  %v269 = vpop.f32.mrb[0].mxu0
  %270 = vmatprep.mubr.f32.mxu0 0.0
  %271 = vmatmul.mubr.f32.gmra.mrb[0].mxu0 %v147
  %v272 = vpop.f32.mrb[0].mxu0
  %v273 = vadd.f32 %v76, %v272
  %v274 = vpop.f32.mrb[0].mxu0
  %275 = vmatprep.mubr.f32.mxu0 0.0
  %276 = vmatmul.mubr.f32.gmra.mrb[0].mxu0 %v150
  %v277 = vpop.f32.mrb[0].mxu0
  %v278 = vadd.f32 %v81, %v277
  %v279 = vpop.f32.mrb[0].mxu0
  %280 = vmatprep.mubr.f32.mxu0 0.0
  %281 = vmatmul.mubr.f32.gmra.mrb[0].mxu0 %v153
  %v282 = vpop.f32.mrb[0].mxu0
  %v283 = vadd.f32 %v86, %v282
  %v284 = vpop.f32.mrb[0].mxu0
  %285 = vmatprep.mubr.f32.mxu0 0.0
  %286 = vmatmul.mubr.f32.gmra.mrb[0].mxu0 %v156
  %v287 = vpop.f32.mrb[0].mxu0
  %v288 = vadd.f32 %v91, %v287
  %v289 = vpop.f32.mrb[0].mxu0
  %290 = vmatprep.mubr.f32.mxu0 0.0
  %291 = vmatmul.mubr.f32.gmra.mrb[0].mxu0 %v159
  %v292 = vpop.f32.mrb[0].mxu0
  %v293 = vadd.f32 %v96, %v292
  %v294 = vpop.f32.mrb[0].mxu0
  %295 = vmatprep.mubr.f32.mxu0 0.0
  %296 = vmatmul.mubr.f32.gmra.mrb[0].mxu0 %v162
  %v297 = vpop.f32.mrb[0].mxu0
  %v298 = vadd.f32 %v101, %v297
  %v299 = vpop.f32.mrb[0].mxu0
  %300 = vmatprep.mubr.f32.mxu0 0.0
  %301 = vmatmul.mubr.f32.gmra.mrb[0].mxu0 %v165
  %v302 = vpop.f32.mrb[0].mxu0
  %v303 = vadd.f32 %v106, %v302
  %v304 = vpop.f32.mrb[0].mxu0
  %305 = vmatprep.mubr.f32.mxu0 0.0
  %306 = vmatmul.mubr.f32.gmra.mrb[0].mxu0 %v168
  %v307 = vpop.f32.mrb[0].mxu0
  %v308 = vadd.f32 %v111, %v307
  %v309 = vpop.f32.mrb[0].mxu0
  %310 = vmatprep.mubr.f32.mxu0 0.0
  %311 = vmatmul.mubr.f32.gmra.mrb[0].mxu0 %v171
  %v312 = vpop.f32.mrb[0].mxu0
  %v313 = vadd.f32 %v116, %v312
  %v314 = vpop.f32.mrb[0].mxu0
  %315 = vmatprep.mubr.f32.mxu0 0.0
  %316 = vmatmul.mubr.f32.gmra.mrb[0].mxu0 %v174
  %v317 = vpop.f32.mrb[0].mxu0
  %v318 = vadd.f32 %v121, %v317
  %v319 = vpop.f32.mrb[0].mxu0
  %320 = vmatprep.mubr.f32.mxu0 0.0
  %321 = vmatmul.mubr.f32.gmra.mrb[0].mxu0 %v177
  %v322 = vpop.f32.mrb[0].mxu0
  %v323 = vadd.f32 %v126, %v322
  %v324 = vpop.f32.mrb[0].mxu0
  %325 = vmatprep.mubr.f32.mxu0 0.0
  %326 = vmatmul.mubr.f32.gmra.mrb[0].mxu0 %v180
  %v327 = vpop.f32.mrb[0].mxu0
  %v328 = vadd.f32 %v131, %v327
  %v329 = vpop.f32.mrb[0].mxu0
  %330 = vdwg.mxu0
  %v331 = vmax.f32 %v253, 0.0
  %v332 = vmax.f32 %v258, 0.0
  %v333 = vmax.f32 %v263, 0.0
  %v334 = vmax.f32 %v268, 0.0
  %v335 = vmax.f32 %v273, 0.0
  %v336 = vmax.f32 %v278, 0.0
  %v337 = vmax.f32 %v283, 0.0
  %v338 = vmax.f32 %v288, 0.0
  %v339 = vmax.f32 %v293, 0.0
  %v340 = vmax.f32 %v298, 0.0
  %v341 = vmax.f32 %v303, 0.0
  %v342 = vmax.f32 %v308, 0.0
  %v343 = vmax.f32 %v313, 0.0
  %v344 = vmax.f32 %v318, 0.0
  %v345 = vmax.f32 %v323, 0.0
  %v346 = vmax.f32 %v328, 0.0
  %v347 = vld [vmem:[%s3] sm:$0xff]
  %v348 = vld [vmem:[%s4] sm:$0xff]
  %350 = vset.pattern.permute.xlu0 0
  %351 = vperm.xlu0 %350, %v348
  %v352 = vpop.permute.xlu0 %351
  %354 = vmatprep.subr.mxu0 0.0
  %355 = vmatpush1.msra.mxu0 %v331
  %356 = vmatprep.subr.mxu0 0.0
  %357 = vmatpush1.msra.mxu0 %v332
  %358 = vmatprep.subr.mxu0 0.0
  %359 = vmatpush1.msra.mxu0 %v333
  %360 = vmatprep.subr.mxu0 0.0
  %361 = vmatpush1.msra.mxu0 %v334
  %362 = vmatprep.subr.mxu0 0.0
  %363 = vmatpush1.msra.mxu0 %v335
  %364 = vmatprep.subr.mxu0 0.0
  %365 = vmatpush1.msra.mxu0 %v336
  %366 = vmatprep.subr.mxu0 0.0
  %367 = vmatpush1.msra.mxu0 %v337
  %368 = vmatprep.subr.mxu0 0.0
  %369 = vmatpush1.msra.mxu0 %v338
  %370 = vmatprep.subr.mxu0 0.0
  %371 = vmatpush1.msra.mxu0 %v339
  %372 = vmatprep.subr.mxu0 0.0
  %373 = vmatpush1.msra.mxu0 %v340
  %374 = vmatprep.subr.mxu0 0.0
  %375 = vmatpush1.msra.mxu0 %v341
  %376 = vmatprep.subr.mxu0 0.0
  %377 = vmatpush1.msra.mxu0 %v342
  %378 = vmatprep.subr.mxu0 0.0
  %379 = vmatpush1.msra.mxu0 %v343
  %380 = vmatprep.subr.mxu0 0.0
  %381 = vmatpush1.msra.mxu0 %v344
  %382 = vmatprep.subr.mxu0 0.0
  %383 = vmatpush1.msra.mxu0 %v345
  %384 = vmatprep.subr.mxu0 0.0
  %385 = vmatpush1.msra.mxu0 %v346
  %386 = vmatprep.subr.mxu0 0.0
  %387 = vmatpush1.msra.mxu0 0.0
  %388 = vmatprep.subr.mxu0 0.0
  %389 = vmatpush1.msra.mxu0 0.0
  %390 = vmatprep.subr.mxu0 0.0
  %391 = vmatpush1.msra.mxu0 0.0
  %392 = vmatprep.subr.mxu0 0.0
  %393 = vmatpush1.msra.mxu0 0.0
  %394 = vmatprep.subr.mxu0 0.0
  %395 = vmatpush1.msra.mxu0 0.0
  %396 = vmatprep.subr.mxu0 0.0
  %397 = vmatpush1.msra.mxu0 0.0
  %398 = vmatprep.subr.mxu0 0.0
  %399 = vmatpush1.msra.mxu0 0.0
  %400 = vmatprep.subr.mxu0 0.0
  %401 = vmatpush1.msra.mxu0 0.0
  %402 = vmatprep.subr.mxu0 0.0
  %403 = vmatpush1.msra.mxu0 0.0
  %404 = vmatprep.subr.mxu0 0.0
  %405 = vmatpush1.msra.mxu0 0.0
  %406 = vmatprep.subr.mxu0 0.0
  %407 = vmatpush1.msra.mxu0 0.0
  %408 = vmatprep.subr.mxu0 0.0
  %409 = vmatpush1.msra.mxu0 0.0
  %410 = vmatprep.subr.mxu0 0.0
  %411 = vmatpush1.msra.mxu0 0.0
  %412 = vmatprep.subr.mxu0 0.0
  %413 = vmatpush1.msra.mxu0 0.0
  %414 = vmatprep.subr.mxu0 0.0
  %415 = vmatpush1.msra.mxu0 0.0
  %416 = vmatprep.subr.mxu0 0.0
  %417 = vmatpush1.msra.mxu0 0.0
  %418 = vmatprep.mubr.f32.mxu0 0.0
  %419 = vmatmul.mubr.f32.gmra.mrb[0].mxu0 %v347
  %v420 = vpop.f32.mrb[0].mxu0
  %v421 = vadd.f32 %v352, %v420
  %v422 = vpop.f32.mrb[0].mxu0
  %423 = vdwg.mxu0
  %vm424 = vcmask 64512
  %425 = vst.msk [vmem:[%s5] sm:$0xff] %vm424, %v421
  // Predicated region
  $region22: #{actor_critic_forward.1} parent=0 // pred_check
    _
  $region23: #{actor_critic_forward.1} parent=0 // pred_check_branch
    %427 = sbr.rel (0) target = $region25
  $region24: #{actor_critic_forward.1} parent=0 // pred_region
    _
  $region25: #{actor_critic_forward.1} parent=0 // pred_fallthru
    _
  // Predicated region
  $region26: #{actor_critic_forward.1} parent=0 // pred_check
    _
  $region27: #{actor_critic_forward.1} parent=0 // pred_check_branch
    %429 = sbr.rel (0) target = $region29
  $region28: #{actor_critic_forward.1} parent=0 // pred_region
    _
  $region29: #{actor_critic_forward.1} parent=0 // pred_fallthru
    _

</llo_original>
